<compile_context>
chip_gen: v7x
topology: tpu7x:2x2x1
jax: 0.10.0
libtpu: 0.0.40
codegen_flags: <defaults>
</compile_context>

<pallas_src>
import functools

import jax
import jax.numpy as jnp
import numpy as np
from jax import lax
from jax.experimental import pallas as pl
from jax.experimental.pallas import tpu as pltpu

_NETWORK_MAX_K = 25        # selection network up to this window size, bisection beyond
_LANE = 128
_SUBLANE = 8
_CHUNK_TARGET = 512        # lane-chunk width (multiple of 128)
_STATIC_CHUNK_LOOP_MAX = 2 # unroll the chunk loop statically up to this many chunks
_SIGN_MASK = 0x7FFFFFFF
_INT32_MIN = int(np.iinfo(np.int32).min)


def _round_up(x, m):
    return ((x + m - 1) // m) * m


# ---------------------------------------------------------------------------
# in-kernel median helpers
# ---------------------------------------------------------------------------
def _monotone_key(x_f32):
    """Bitcast f32 -> int32 whose signed ordering matches the float ordering."""
    bits = pltpu.bitcast(x_f32, jnp.int32)
    return jnp.where(bits < 0, bits ^ jnp.int32(_SIGN_MASK), bits)


def _key_to_float(key):
    bits = jnp.where(key < 0, key ^ jnp.int32(_SIGN_MASK), key)
    return pltpu.bitcast(bits, jnp.float32)


def _med3(a, b, c):
    return jnp.maximum(jnp.minimum(a, b), jnp.minimum(jnp.maximum(a, b), c))


def _median_selection(load, k):
    """Exact median of k (odd) window slices via forgetful min/max selection.

    Keeps only ~(k+3)/2 live tiles (vs. k for a full sort) and does roughly
    half the min/max ops of an odd-even transposition sort. `load(d)` returns
    the d-th window slice and is called lazily to keep live ranges short.
    """
    if k == 1:
        return load(0)
    if k == 3:
        return _med3(load(0), load(1), load(2))
    s0 = (k + 3) // 2
    buf = [load(d) for d in range(s0)]
    nxt = s0
    while nxt < k:
        m = len(buf)
        for i in range(1, m):                       # global min -> buf[0]
            lo = jnp.minimum(buf[0], buf[i])
            hi = jnp.maximum(buf[0], buf[i])
            buf[0], buf[i] = lo, hi
        for i in range(2, m):                       # max of the rest -> buf[m-1]
            lo = jnp.minimum(buf[i - 1], buf[i])
            hi = jnp.maximum(buf[i - 1], buf[i])
            buf[i - 1], buf[i] = lo, hi
        buf = buf[1:m - 1]                          # drop min & max (cannot be median)
        buf.append(load(nxt))
        nxt += 1
    a, b, c = buf
    return _med3(a, b, c)


def _median_bisect(keys_ref, k, shape, unroll):
    """Exact sliding median via bitwise binary search on hoisted int32 keys.

    keys_ref[d] (d < k) already holds the d-th shifted monotone key slice, so
    each of the 31+1 passes is only a VMEM load + compare + accumulate per
    window offset (no XLU relayout inside the bit loop).
    """
    r = k // 2                                      # 0-based rank of the median

    def count_below(trial):
        cnt = jnp.zeros(shape, jnp.int32)
        for d in range(k):                          # static unroll: load+cmp+add
            cnt = cnt + (keys_ref[d] < trial)
        return cnt

    def step(pref, inc):
        trial = pref + inc
        pref = jnp.where(count_below(trial) <= r, trial, pref)
        return pref, jnp.right_shift(inc, 1)

    # Sign bit first (trial value 0) to avoid int32 overflow games.
    c0 = count_below(jnp.int32(0))
    prefix = jnp.where(c0 <= r, jnp.int32(0), jnp.int32(_INT32_MIN))
    inc0 = jnp.int32(1 << 30)

    n_bits = 31
    main = n_bits // unroll

    def body(_, carry):
        pref, inc = carry
        for _u in range(unroll):                    # manual unroll -> LLO visibility
            pref, inc = step(pref, inc)
        return pref, inc

    prefix, inc = lax.fori_loop(0, main, body, (prefix, inc0))
    for _u in range(n_bits - main * unroll):        # remainder bits
        prefix, inc = step(prefix, inc)
    return _key_to_float(prefix)


def _medfilt_chunk(src_ref, k, start, chunk, keys_ref, unroll):
    """Median (window k) of the 'nearest'-pre-extended src for cols [start, start+chunk)."""
    h = k // 2

    def load(d):
        return src_ref[:, pl.ds(start - h + d, chunk)].astype(jnp.float32)

    if k <= _NETWORK_MAX_K:
        return _median_selection(load, k)

    # Bisection path: build the k shifted keys once (hoisted out of the bit loop).
    for d in range(k):
        keys_ref[d] = _monotone_key(load(d))
    return _median_bisect(keys_ref, k, keys_ref.shape[1:], unroll)


# ---------------------------------------------------------------------------
# kernel
# ---------------------------------------------------------------------------
def _baseline_remove_kernel(x_ref, o_ref, *scratch, k1, k2, p_left, s_len,
                            chunk, n_chunks, u1, u2):
    b_ref = scratch[0]                              # (tile_rows, W) f32 intermediate
    keys_ref = scratch[1] if len(scratch) > 1 else None
    tr, w = x_ref.shape

    def chunk_loop(body):
        if n_chunks <= _STATIC_CHUNK_LOOP_MAX:
            for c in range(n_chunks):
                body(c * chunk)
        else:
            @pl.loop(0, n_chunks)
            def _(c):
                body(pl.multiple_of(c * chunk, _LANE))

    # ---- pass 1: b = medfilt(x, k1) over the signal chunks ------------------
    def pass1(off):
        start = p_left + off
        res = _medfilt_chunk(x_ref, k1, start, chunk, keys_ref, u1)
        b_ref[:, pl.ds(start, chunk)] = res

    chunk_loop(pass1)

    # ---- 'nearest' re-extension of the intermediate baseline ----------------
    if k2 > 1:
        if p_left > 0:
            edge_l = b_ref[:, p_left:p_left + 1]
            b_ref[:, 0:p_left] = jnp.broadcast_to(edge_l, (tr, p_left))
        right0 = p_left + s_len
        if right0 < w:
            edge_r = b_ref[:, right0 - 1:right0]
            b_ref[:, right0:w] = jnp.broadcast_to(edge_r, (tr, w - right0))

    # ---- pass 2: baseline = medfilt(b, k2); out = x - baseline --------------
    def pass2(off):
        start = p_left + off
        base = _medfilt_chunk(b_ref, k2, start, chunk, keys_ref, u2)
        x_c = x_ref[:, pl.ds(start, chunk)].astype(jnp.float32)
        o_ref[:, pl.ds(off, chunk)] = (x_c - base).astype(o_ref.dtype)

    chunk_loop(pass2)


# ---------------------------------------------------------------------------
# wrapper
# ---------------------------------------------------------------------------
def baseline_remove(sig, fs, window1=0.2, window2=0.6):
    """sig: (batch, lead, siglen) -> baseline-removed signal, same shape/dtype."""
    B, L, S = sig.shape
    k1 = 2 * (int(window1 * fs) // 2) + 1
    k2 = 2 * (int(window2 * fs) // 2) + 1
    if k2 < k1:                                     # mirror the module's window swap
        k1, k2 = k2, k1
    h2 = k2 // 2

    R = B * L
    x2d = sig.reshape(R, S)

    # Lane-chunk geometry: chunk starts are 128-aligned (dense stores), the
    # halo pad p_left >= h2 keeps every window read in bounds.
    chunk = min(_CHUNK_TARGET, _round_up(S, _LANE))
    n_chunks = -(-S // chunk)
    w_out = n_chunks * chunk
    p_left = _round_up(h2, _LANE) if h2 > 0 else 0
    W = 2 * p_left + w_out

    in_bytes = jnp.dtype(sig.dtype).itemsize

    # --- VMEM-driven tile sizing (v5e/v6e: big tiles; v7x: 64 MiB budget) ----
    bisect_ks = [k for k in (k1, k2) if k > _NETWORK_MAX_K]
    k_scr = max(bisect_ks) if bisect_ks else 0
    net_ks = [k for k in (k1, k2) if 1 < k <= _NETWORK_MAX_K]
    net_live = max([(k + 3) // 2 + 3 for k in net_ks], default=6)

    vmem_cap = 64 * 1024 * 1024
    try:
        vmem_cap = int(pltpu.get_tpu_info().vmem_capacity_bytes)
    except Exception:
        pass

    per_row = (2 * W * in_bytes                     # input block (double-buffered)
               + 2 * w_out * in_bytes               # output block (double-buffered)
               + 4 * W                              # f32 intermediate-baseline scratch
               + 4 * chunk * k_scr                  # hoisted-key scratch (bisection)
               + 4 * chunk * (net_live + 8))        # live network copies + temporaries
    budget = int(vmem_cap * 0.55)
    tile_rows = max(_SUBLANE, (budget // per_row) // _SUBLANE * _SUBLANE)
    tile_rows = min(tile_rows, 512, _round_up(R, _SUBLANE))
    if R >= 2 * _SUBLANE:                           # keep >=2 grid steps (v7x megacore)
        tile_rows = min(tile_rows, _round_up((R + 1) // 2, _SUBLANE))
    est_vmem = per_row * tile_rows + (4 << 20)
    vmem_limit = max(32 << 20, min(int(vmem_cap * 0.9), est_vmem + (8 << 20)))

    R_pad = _round_up(R, tile_rows)
    # Single edge pad provides the 'nearest' halo (and row padding).
    x_pad = jnp.pad(x2d, ((0, R_pad - R), (p_left, W - p_left - S)), mode="edge")

    def _unroll_for(k):
        if k <= _NETWORK_MAX_K:
            return 1
        return 4 if k <= 64 else (2 if k <= 192 else 1)

    def _pass_cost(k):
        if k <= 1:
            return 1
        if k <= _NETWORK_MAX_K:
            if k == 3:
                return 6
            s0 = (k + 3) // 2
            return 2 * sum(2 * m - 3 for m in range(4, s0 + 1)) + 6 + k
        return 33 * k * 3 + 3 * k

    flops = R_pad * w_out * (_pass_cost(k1) + _pass_cost(k2) + 2)
    cost = pl.CostEstimate(flops=int(flops), transcendentals=0,
                           bytes_accessed=int(R_pad * (W + w_out) * in_bytes))

    scratch = [pltpu.VMEM((tile_rows, W), jnp.float32)]
    if k_scr:
        scratch.append(pltpu.VMEM((k_scr, tile_rows, chunk), jnp.int32))

    kern = functools.partial(
        _baseline_remove_kernel, k1=k1, k2=k2, p_left=p_left, s_len=S,
        chunk=chunk, n_chunks=n_chunks, u1=_unroll_for(k1), u2=_unroll_for(k2))

    out = pl.pallas_call(
        kern,
        out_shape=jax.ShapeDtypeStruct((R_pad, w_out), sig.dtype),
        grid=(R_pad // tile_rows,),
        in_specs=[pl.BlockSpec((tile_rows, W), lambda i: (i, 0))],
        out_specs=pl.BlockSpec((tile_rows, w_out), lambda i: (i, 0)),
        scratch_shapes=scratch,
        compiler_params=pltpu.CompilerParams(
            dimension_semantics=("parallel",),
            vmem_limit_bytes=int(vmem_limit)),
        cost_estimate=cost,
    )(x_pad)

    return out[:R, :S].reshape(B, L, S)


# ---------------------------------------------------------------------------
# numpy reference + demo
# ---------------------------------------------------------------------------
def _numpy_reference(sig, fs, window1=0.2, window2=0.6):
    k1 = 2 * (int(window1 * fs) // 2) + 1
    k2 = 2 * (int(window2 * fs) // 2) + 1
    if k2 < k1:
        k1, k2 = k2, k1

    def medfilt_nearest(x, k):
        if k <= 1:
            return x
        h = k // 2
        xp = np.pad(x, [(0, 0)] * (x.ndim - 1) + [(h, h)], mode="edge")
        win = np.stack([xp[..., d:d + x.shape[-1]] for d in range(k)], axis=0)
        return np.median(win, axis=0)

    x = np.asarray(sig, dtype=np.float64)
    b = medfilt_nearest(x, k1)
    b = medfilt_nearest(b, k2)
    return (x - b).astype(np.asarray(sig).dtype)


if __name__ == "__main__":
    root = jax.random.PRNGKey(0)
    k_a, k_b, k_c = jax.random.split(root, 3)

    # Case 1: fs=10 -> k=(3,7): pure selection-network path, single lane chunk.
    B, L, S, fs = 2, 4, 128, 10
    t = jnp.arange(S, dtype=jnp.float32) / S
    sig = jax.random.normal(k_a, (B, L, S), dtype=jnp.float32)
    sig = sig + 2.0 * jnp.sin(2.0 * jnp.pi * t)[None, None, :]
    out = jax.block_until_ready(baseline_remove(sig, fs))
    ref = _numpy_reference(np.asarray(sig), fs)
    np.testing.assert_allclose(np.asarray(out), ref, rtol=1e-5, atol=1e-5)

    # Case 2: fs=80 -> k=(17,49): network for k1, hoisted-key bisection for k2.
    B2, L2, S2, fs2 = 1, 2, 256, 80
    t2 = jnp.arange(S2, dtype=jnp.float32) / S2
    sig2 = jax.random.normal(k_b, (B2, L2, S2), dtype=jnp.float32)
    sig2 = sig2 + 1.5 * jnp.sin(2.0 * jnp.pi * 2.0 * t2)[None, None, :]
    out2 = jax.block_until_ready(baseline_remove(sig2, fs2))
    ref2 = _numpy_reference(np.asarray(sig2), fs2)
    np.testing.assert_allclose(np.asarray(out2), ref2, rtol=1e-5, atol=1e-5)

    # Case 3: fs=150, siglen=1200 -> k=(31,91): multi-chunk pl.loop path with
    # the bisection (hoisted keys) nested inside the chunk loop.
    B3, L3, S3, fs3 = 1, 3, 1200, 150
    t3 = jnp.arange(S3, dtype=jnp.float32) / S3
    sig3 = jax.random.normal(k_c, (B3, L3, S3), dtype=jnp.float32)
    sig3 = sig3 + 1.0 * jnp.sin(2.0 * jnp.pi * 3.0 * t3)[None, None, :]
    out3 = jax.block_until_ready(baseline_remove(sig3, fs3))
    ref3 = _numpy_reference(np.asarray(sig3), fs3)
    np.testing.assert_allclose(np.asarray(out3), ref3, rtol=1e-5, atol=1e-5)

    print("KERNEL_OK")
</pallas_src>

<mosaic_0001>
module attributes {stable_mosaic.version = 11 : i64} {
  func.func @_baseline_remove_kernel(%arg0: i32, %arg1: memref<8x384xf32, #tpu.memory_space<vmem>>, %arg2: memref<8x128xf32, #tpu.memory_space<vmem>>, %arg3: memref<8x384xf32, #tpu.memory_space<vmem>>) attributes {dimension_semantics = [#tpu.dimension_semantics<parallel>], iteration_bounds = array<i64: 1>, scalar_prefetch = 0 : i64, scratch_operands = 1 : i64, tpu.core_type = #tpu.core_type<tc>, window_params = [{transform_indices = @transform_0, window_bounds = array<i64: 8, 384>}, {transform_indices = @transform_1, window_bounds = array<i64: 8, 128>}]} {
    %c0 = arith.constant 0 : index
    %c127 = arith.constant 127 : index
    %0 = vector.load %arg1[%c0, %c127] : memref<8x384xf32, #tpu.memory_space<vmem>>, vector<8x128xf32>
    %c0_0 = arith.constant 0 : index
    %c128 = arith.constant 128 : index
    %1 = vector.load %arg1[%c0_0, %c128] : memref<8x384xf32, #tpu.memory_space<vmem>>, vector<8x128xf32>
    %c0_1 = arith.constant 0 : index
    %c129 = arith.constant 129 : index
    %2 = vector.load %arg1[%c0_1, %c129] : memref<8x384xf32, #tpu.memory_space<vmem>>, vector<8x128xf32>
    %3 = arith.minimumf %0, %1 : vector<8x128xf32>
    %4 = arith.maximumf %0, %1 : vector<8x128xf32>
    %5 = arith.minimumf %4, %2 : vector<8x128xf32>
    %6 = arith.maximumf %3, %5 : vector<8x128xf32>
    %c0_2 = arith.constant 0 : index
    %c128_3 = arith.constant 128 : index
    %7 = vector.load %arg3[%c0_2, %c128_3] : memref<8x384xf32, #tpu.memory_space<vmem>>, vector<8x128xf32>
    tpu.vector_store %arg3[%c0_2, %c128_3], %6 {strides = array<i32>} : memref<8x384xf32, #tpu.memory_space<vmem>>, vector<8x128xf32>,
    %c0_4 = arith.constant 0 : index
    %c128_5 = arith.constant 128 : index
    %8 = vector.load %arg3[%c0_4, %c128_5] : memref<8x384xf32, #tpu.memory_space<vmem>>, vector<8x1xf32>
    %9 = vector.shape_cast %8 : vector<8x1xf32> to vector<8x1xf32>
    %10 = vector.broadcast %9 : vector<8x1xf32> to vector<8x128xf32>
    %c0_6 = arith.constant 0 : index
    %c0_7 = arith.constant 0 : index
    %11 = vector.load %arg3[%c0_6, %c0_7] : memref<8x384xf32, #tpu.memory_space<vmem>>, vector<8x128xf32>
    tpu.vector_store %arg3[%c0_6, %c0_7], %10 {strides = array<i32>} : memref<8x384xf32, #tpu.memory_space<vmem>>, vector<8x128xf32>,
    %c0_8 = arith.constant 0 : index
    %c255 = arith.constant 255 : index
    %12 = vector.load %arg3[%c0_8, %c255] : memref<8x384xf32, #tpu.memory_space<vmem>>, vector<8x1xf32>
    %13 = vector.shape_cast %12 : vector<8x1xf32> to vector<8x1xf32>
    %14 = vector.broadcast %13 : vector<8x1xf32> to vector<8x128xf32>
    %c0_9 = arith.constant 0 : index
    %c256 = arith.constant 256 : index
    %15 = vector.load %arg3[%c0_9, %c256] : memref<8x384xf32, #tpu.memory_space<vmem>>, vector<8x128xf32>
    tpu.vector_store %arg3[%c0_9, %c256], %14 {strides = array<i32>} : memref<8x384xf32, #tpu.memory_space<vmem>>, vector<8x128xf32>,
    %c0_10 = arith.constant 0 : index
    %c125 = arith.constant 125 : index
    %16 = vector.load %arg3[%c0_10, %c125] : memref<8x384xf32, #tpu.memory_space<vmem>>, vector<8x128xf32>
    %c0_11 = arith.constant 0 : index
    %c126 = arith.constant 126 : index
    %17 = vector.load %arg3[%c0_11, %c126] : memref<8x384xf32, #tpu.memory_space<vmem>>, vector<8x128xf32>
    %c0_12 = arith.constant 0 : index
    %c127_13 = arith.constant 127 : index
    %18 = vector.load %arg3[%c0_12, %c127_13] : memref<8x384xf32, #tpu.memory_space<vmem>>, vector<8x128xf32>
    %c0_14 = arith.constant 0 : index
    %c128_15 = arith.constant 128 : index
    %19 = vector.load %arg3[%c0_14, %c128_15] : memref<8x384xf32, #tpu.memory_space<vmem>>, vector<8x128xf32>
    %c0_16 = arith.constant 0 : index
    %c129_17 = arith.constant 129 : index
    %20 = vector.load %arg3[%c0_16, %c129_17] : memref<8x384xf32, #tpu.memory_space<vmem>>, vector<8x128xf32>
    %21 = arith.minimumf %16, %17 : vector<8x128xf32>
    %22 = arith.maximumf %16, %17 : vector<8x128xf32>
    %23 = arith.minimumf %21, %18 : vector<8x128xf32>
    %24 = arith.maximumf %21, %18 : vector<8x128xf32>
    %25 = arith.minimumf %23, %19 : vector<8x128xf32>
    %26 = arith.maximumf %23, %19 : vector<8x128xf32>
    %27 = arith.maximumf %25, %20 : vector<8x128xf32>
    %28 = arith.minimumf %22, %24 : vector<8x128xf32>
    %29 = arith.maximumf %22, %24 : vector<8x128xf32>
    %30 = arith.minimumf %29, %26 : vector<8x128xf32>
    %31 = arith.maximumf %29, %26 : vector<8x128xf32>
    %32 = arith.minimumf %31, %27 : vector<8x128xf32>
    %c0_18 = arith.constant 0 : index
    %c130 = arith.constant 130 : index
    %33 = vector.load %arg3[%c0_18, %c130] : memref<8x384xf32, #tpu.memory_space<vmem>>, vector<8x128xf32>
    %34 = arith.minimumf %28, %30 : vector<8x128xf32>
    %35 = arith.maximumf %28, %30 : vector<8x128xf32>
    %36 = arith.minimumf %34, %32 : vector<8x128xf32>
    %37 = arith.maximumf %34, %32 : vector<8x128xf32>
    %38 = arith.maximumf %36, %33 : vector<8x128xf32>
    %39 = arith.minimumf %35, %37 : vector<8x128xf32>
    %40 = arith.maximumf %35, %37 : vector<8x128xf32>
    %41 = arith.minimumf %40, %38 : vector<8x128xf32>
    %c0_19 = arith.constant 0 : index
    %c131 = arith.constant 131 : index
    %42 = vector.load %arg3[%c0_19, %c131] : memref<8x384xf32, #tpu.memory_space<vmem>>, vector<8x128xf32>
    %43 = arith.minimumf %39, %41 : vector<8x128xf32>
    %44 = arith.maximumf %39, %41 : vector<8x128xf32>
    %45 = arith.minimumf %44, %42 : vector<8x128xf32>
    %46 = arith.maximumf %43, %45 : vector<8x128xf32>
    %c0_20 = arith.constant 0 : index
    %c128_21 = arith.constant 128 : index
    %47 = vector.load %arg1[%c0_20, %c128_21] : memref<8x384xf32, #tpu.memory_space<vmem>>, vector<8x128xf32>
    %48 = arith.subf %47, %46 : vector<8x128xf32>
    %c0_22 = arith.constant 0 : index
    %c0_23 = arith.constant 0 : index
    %49 = vector.load %arg2[%c0_22, %c0_23] : memref<8x128xf32, #tpu.memory_space<vmem>>, vector<8x128xf32>
    tpu.vector_store %arg2[%c0_22, %c0_23], %48 {strides = array<i32>} : memref<8x128xf32, #tpu.memory_space<vmem>>, vector<8x128xf32>,
    return
  }
  func.func @transform_0(%arg0: i32) -> (i32, i32) {
    %c0_i32 = arith.constant 0 : i32
    %c0_i32_0 = arith.constant 0 : i32
    return %arg0, %c0_i32 : i32, i32
  }
  func.func @transform_1(%arg0: i32) -> (i32, i32) {
    %c0_i32 = arith.constant 0 : i32
    %c0_i32_0 = arith.constant 0 : i32
    return %arg0, %c0_i32 : i32, i32
  }
}

</mosaic_0001>

<llo_original>
// kernel: tpu_custom_call.1
$region0: #{tpu_custom_call.1}
  #allocation0 [shape = 'u32[]', space=smem, size = 0x4, offset = 0x4, fixed_abs, tag = 'smem constant byte address 0x4 - core index']
  #allocation1 [shape = 'u32[144,128]{1,0:T(1,128)}', space=vmem, size = 0x12000, scoped, tag = 'internal scratch']
  #allocation2 [shape = 'f32[8,384]{1,0:T(8,128)}', space=vmem, size = 0x3000, scoped, tag = 'scratch operand']
  %s0 = inlined_call_operand.hbm [shape: f32[8,384], index: 0, kind: input, shape index: {}]
  %s1 = inlined_call_operand.hbm [shape: f32[8,128], index: 1, kind: output, shape index: {}]
  %s2 = sld [smem:[#allocation0]]
  $region18: #{tpu_custom_call.1} parent=0
    _
  %s4 = ssub.s32 1, %s2
  %s5 = scalar_select 0, %s4, %s2
  $region1: #{tpu_custom_call.1} parent=0
    #allocation3 [shape = 'u8[12288]{0}', space=vmem, size = 0x3000, scoped, tag = 'input window, operand 0, single buffered']
    #allocation4 [shape = 's32[1]{0}', space=sflag, size = 0x4, scoped, tag = 'scoped memory for tpu_custom_call.1']
    #allocation5 [shape = 's32[1]{0}', space=sflag, size = 0x4, scoped, tag = 'scoped memory for tpu_custom_call.1']
    #allocation6 [shape = 'u8[4096]{0}', space=vmem, size = 0x1000, scoped, tag = 'output window, operand 0, single buffered']
    %6 = vsyncpa [#allocation4], 0
    %7 = vsyncpa [#allocation5], 0
    // Predicated region
    $region2: #{tpu_custom_call.1} parent=1 // pred_check
      _
    $region3: #{tpu_custom_call.1} parent=1 // pred_check_branch
      %9 = sbr.rel (0) target = $region5
    $region4: #{tpu_custom_call.1} parent=1 // pred_region
      %s11 = ssub.s32 384, 384
      %12 = vsyncadd [#allocation4], %s11
      %s14 = sshll.u32 [#allocation3], 4
      %s15 = int_to_ptr.vmem [resolvable:$true] %s14
      %17 = dma.hbm_to_vmem [thread:$0]  %s0, 384, %s15, [#allocation4]
    $region5: #{tpu_custom_call.1} parent=1 // pred_fallthru
      _
    // Predicated region
    $region6: #{tpu_custom_call.1} parent=1 // pred_check
      _
    $region7: #{tpu_custom_call.1} parent=1 // pred_check_branch
      %19 = sbr.rel (0) target = $region9
    $region8: #{tpu_custom_call.1} parent=1 // pred_region
      %20 = dma.done [#allocation4], 384
    $region9: #{tpu_custom_call.1} parent=1 // pred_fallthru
      _
    %v21 = vld [vmem:[#allocation3] sm:$0xff]
    %v22 = vld [vmem:[#allocation3 + $0x8] sm:$0xff]
    %v23 = vld [vmem:[#allocation3 + $0x8] sm:$0xff]
    %v24 = vld [vmem:[#allocation3 + $0x10] sm:$0xff]
    %26 = vrot.lane.b32.xlu0 %v22, 127
    %v27 = vpop.permute.xlu0 %26
    %v29 = vmin.f32 %v21, %v27
    %v30 = vmin.f32 %v22, %v27
    %v31 = vmax.f32 %v21, %v27
    %v32 = vmax.f32 %v22, %v27
    %35 = vrot.lane.b32.xlu0 %v23, 126
    %v36 = vpop.permute.xlu0 %35
    %37 = vrot.lane.b32.xlu0 %v24, 126
    %v38 = vpop.permute.xlu0 %37
    %vm39 = vcmask 1031168
    %v40 = vsel %vm39, %v36, %v38
    %v43 = vmin.f32 %v31, %v36
    %v44 = vmin.f32 %v32, %v40
    %v45 = vmax.f32 %v29, %v43
    %v46 = vmax.f32 %v30, %v44
    %49 = vrot.lane.b32.xlu0 %v45, 1
    %v50 = vpop.permute.xlu0 %49
    %51 = vrot.lane.b32.xlu0 %v46, 1
    %v52 = vpop.permute.xlu0 %51
    %vm53 = vcmask 7168
    %v54 = vsel %vm53, %v50, %v52
    %56 = vst [vmem:[#allocation2 + $0x8] sm:$0xff] %v54
    %v57 = vld [vmem:[#allocation2 + $0x8] sm:$0xff]
    %59 = vset.pattern.permute.xlu0 0
    %60 = vperm.xlu0 %59, %v57
    %v61 = vpop.permute.xlu0 %60
    %63 = vst [vmem:[#allocation2] sm:$0xff] %v61
    %v64 = vld [vmem:[#allocation2 + $0x8] sm:$0xff]
    %66 = vset.pattern.permute.xlu0 127
    %67 = vperm.xlu0 %66, %v64
    %v68 = vpop.permute.xlu0 %67
    %70 = vst [vmem:[#allocation2 + $0x10] sm:$0xff] %v68
    %v71 = vld [vmem:[#allocation2] sm:$0xff]
    %v72 = vld [vmem:[#allocation2 + $0x8] sm:$0xff]
    %v73 = vld [vmem:[#allocation2 + $0x8] sm:$0xff]
    %v74 = vld [vmem:[#allocation2 + $0x10] sm:$0xff]
    %77 = vrot.lane.b32.xlu0 %v71, 127
    %v78 = vpop.permute.xlu0 %77
    %79 = vrot.lane.b32.xlu0 %v72, 127
    %v80 = vpop.permute.xlu0 %79
    %vm81 = vcmask 1039360
    %v82 = vsel %vm81, %v78, %v80
    %v85 = vmin.f32 %v71, %v82
    %v86 = vmin.f32 %v72, %v80
    %v87 = vmax.f32 %v71, %v82
    %v88 = vmax.f32 %v72, %v80
    %89 = vrot.lane.b32.xlu0 %v71, 126
    %v90 = vpop.permute.xlu0 %89
    %91 = vrot.lane.b32.xlu0 %v72, 126
    %v92 = vpop.permute.xlu0 %91
    %v93 = vsel %vm39, %v90, %v92
    %v96 = vmin.f32 %v85, %v93
    %v97 = vmin.f32 %v86, %v92
    %v98 = vmax.f32 %v85, %v93
    %v99 = vmax.f32 %v86, %v92
    %100 = vrot.lane.b32.xlu0 %v72, 125
    %v101 = vpop.permute.xlu0 %100
    %v103 = vmin.f32 %v96, %v101
    %v104 = vmin.f32 %v97, %v101
    %v105 = vmax.f32 %v96, %v101
    %v106 = vmax.f32 %v97, %v101
    %109 = vrot.lane.b32.xlu0 %v73, 124
    %v110 = vpop.permute.xlu0 %109
    %111 = vrot.lane.b32.xlu0 %v74, 124
    %v112 = vpop.permute.xlu0 %111
    %vm113 = vcmask 1014784
    %v114 = vsel %vm113, %v110, %v112
    %v117 = vmax.f32 %v103, %v110
    %v118 = vmax.f32 %v104, %v114
    %v119 = vmin.f32 %v87, %v98
    %v120 = vmin.f32 %v88, %v99
    %v121 = vmax.f32 %v87, %v98
    %v122 = vmax.f32 %v88, %v99
    %v123 = vmin.f32 %v121, %v105
    %v124 = vmin.f32 %v122, %v106
    %v125 = vmax.f32 %v121, %v105
    %v126 = vmax.f32 %v122, %v106
    %v127 = vmin.f32 %v125, %v117
    %v128 = vmin.f32 %v126, %v118
    %v129 = vmin.f32 %v119, %v123
    %v130 = vmin.f32 %v120, %v124
    %v131 = vmax.f32 %v119, %v123
    %v132 = vmax.f32 %v120, %v124
    %v133 = vmin.f32 %v129, %v127
    %v134 = vmin.f32 %v130, %v128
    %v135 = vmax.f32 %v129, %v127
    %v136 = vmax.f32 %v130, %v128
    %137 = vrot.lane.b32.xlu0 %v73, 123
    %v138 = vpop.permute.xlu0 %137
    %139 = vrot.lane.b32.xlu0 %v74, 123
    %v140 = vpop.permute.xlu0 %139
    %vm141 = vcmask 1006592
    %v142 = vsel %vm141, %v138, %v140
    %v145 = vmax.f32 %v133, %v138
    %v146 = vmax.f32 %v134, %v142
    %v147 = vmin.f32 %v131, %v135
    %v148 = vmin.f32 %v132, %v136
    %v149 = vmax.f32 %v131, %v135
    %v150 = vmax.f32 %v132, %v136
    %v151 = vmin.f32 %v149, %v145
    %v152 = vmin.f32 %v150, %v146
    %v153 = vmin.f32 %v147, %v151
    %v154 = vmin.f32 %v148, %v152
    %v155 = vmax.f32 %v147, %v151
    %v156 = vmax.f32 %v148, %v152
    %157 = vrot.lane.b32.xlu0 %v73, 122
    %v158 = vpop.permute.xlu0 %157
    %159 = vrot.lane.b32.xlu0 %v74, 122
    %v160 = vpop.permute.xlu0 %159
    %vm161 = vcmask 998400
    %v162 = vsel %vm161, %v158, %v160
    %v165 = vmin.f32 %v155, %v158
    %v166 = vmin.f32 %v156, %v162
    %v167 = vmax.f32 %v153, %v165
    %v168 = vmax.f32 %v154, %v166
    %v169 = vld [vmem:[#allocation3 + $0x8] sm:$0xff]
    %172 = vrot.lane.b32.xlu0 %v167, 3
    %v173 = vpop.permute.xlu0 %172
    %174 = vrot.lane.b32.xlu0 %v168, 3
    %v175 = vpop.permute.xlu0 %174
    %vm176 = vcmask 23552
    %v177 = vsel %vm176, %v173, %v175
    %v179 = vsub.f32 %v169, %v177
    %180 = vst [vmem:[#allocation6] sm:$0xff] %v179
    // Predicated region
    $region10: #{tpu_custom_call.1} parent=1 // pred_check
      _
    $region11: #{tpu_custom_call.1} parent=1 // pred_check_branch
      %182 = sbr.rel (0) target = $region13
    $region12: #{tpu_custom_call.1} parent=1 // pred_region
      %s184 = ssub.s32 128, 128
      %185 = vsyncadd [#allocation5], %s184
      %s187 = sshll.u32 [#allocation6], 4
      %s188 = int_to_ptr.vmem [resolvable:$true] %s187
      %190 = dma.vmem_to_hbm [thread:$0]  %s188, 128, %s1, [#allocation5]
    $region13: #{tpu_custom_call.1} parent=1 // pred_fallthru
      _
    // Predicated region
    $region14: #{tpu_custom_call.1} parent=1 // pred_check
      _
    $region15: #{tpu_custom_call.1} parent=1 // pred_check_branch
      %192 = sbr.rel (0) target = $region17
    $region16: #{tpu_custom_call.1} parent=1 // pred_region
      %193 = dma.done [#allocation5], 128
    $region17: #{tpu_custom_call.1} parent=1 // pred_fallthru
      _
    %194 = vsyncpa [#allocation4], 1
    %195 = vsyncpa [#allocation5], 1

</llo_original>
